<compile_context>
chip_gen: v7x
topology: tpu7x:2x2x1
jax: 0.10.0
libtpu: 0.0.40
codegen_flags: <defaults>
</compile_context>

<pallas_src>
import functools

import jax
import jax.numpy as jnp
from jax.experimental import pallas as pl
from jax.experimental.pallas import tpu as pltpu

KH = 3
KW = 3
NEG_SLOPE = 0.1


def _upconv_kernel(xsrc_ref, w_ref, out_ref, *, s_h, out_w, fold_taps):
    """Fused (H nearest-upsample + 3x3 conv + LeakyReLU) for one output row tile.

    xsrc_ref : (1, src_rows + 2, out_w + 2, cin) VMEM, bf16
               W-upsampled source, zero-padded by 1 px on H and W.  Its block
               index ignores the row-tile axis -> fetched once per batch elem.
    w_ref    : fold_taps: (KH*KW*cin, cout)   else: (KH*KW, cin, cout), bf16
    out_ref  : (1, cout, th*out_w) VMEM, f32 -- channel-major, lane-dense store
    """
    cin = xsrc_ref.shape[3]
    cout = out_ref.shape[1]
    m = out_ref.shape[2]
    th = m // out_w                     # output rows per tile
    th_src = th // s_h                  # source rows per tile

    t = pl.program_id(1)
    row0 = pl.multiple_of(t * th_src, th_src)

    # th_src interior source rows plus one halo row above/below (previous/next
    # source row, or the zero-pad row at the image border) -> reproduces the
    # conv's zero padding and the tile overlap exactly.
    xb = xsrc_ref[0, pl.ds(row0, th_src + 2), :, :]        # (th_src+2, out_w+2, cin)

    if s_h == 1:
        xup = xb
    else:
        # nearest upsample along H: repeat each interior source row s_h times
        # (major-dim broadcast + collapse; no cross-lane data movement).
        body = jnp.broadcast_to(
            xb[1:th_src + 1][:, None, :, :],
            (th_src, s_h, out_w + 2, cin)).reshape(th, out_w + 2, cin)
        xup = jnp.concatenate(
            [xb[0:1], body, xb[th_src + 1:th_src + 2]], axis=0)  # (th+2, out_w+2, cin)

    def tap(kh, kw):                                       # bf16 (m, cin)
        return xup[kh:kh + th, kw:kw + out_w, :].reshape(m, cin)

    if fold_taps:
        # Small cin: fold all 9 taps into the contraction dim -> one matmul
        # that actually fills the MXU K depth.
        patches = jnp.concatenate(
            [tap(kh, kw) for kh in range(KH) for kw in range(KW)], axis=-1)
        acc = jnp.dot(patches, w_ref[...], preferred_element_type=jnp.float32)
    else:
        # Large cin: K = cin already fills the MXU; per-tap accumulating
        # matmuls avoid the (m, 9*cin) im2col buffer and its copy passes
        # (v7x MRB accumulates across taps essentially for free).
        acc = None
        for kh in range(KH):
            for kw in range(KW):
                part = jnp.dot(tap(kh, kw), w_ref[kh * KW + kw],
                               preferred_element_type=jnp.float32)
                acc = part if acc is None else acc + part

    acc = jnp.where(acc >= 0, acc, NEG_SLOPE * acc)        # LeakyReLU(0.1) on f32
    # Channel-major store: last dim th*out_w is a multiple of 128 (or the full
    # image) -> unmasked lane-dense vst; the XLU transpose sits on slack when
    # the kernel is MXU-bound and deletes the wrapper's output transpose.
    out_ref[0] = acc.T.astype(out_ref.dtype)


def _vmem_capacity_bytes():
    """Physical per-core VMEM from the runtime (fallback: v7x's 64 MiB)."""
    try:
        info = pltpu.get_tpu_info()
        cap = getattr(info, "vmem_capacity_bytes", None)
        if cap:
            return int(cap)
    except Exception:
        pass
    return 64 * 1024 * 1024


def _pick_row_tile(src_rows, s_h, out_w, cin, cout, budget_bytes, fold_taps,
                   min_row_tiles=4):
    """Choose the output-row tile height TH.

    Constraints:
      * th_src = TH / s_h divides src_rows (exact tiling, no partial tiles)
      * TH*out_w is a multiple of 128 (lane-dense output block) or TH == out_h
    Preferences (in order): enough row tiles for pipelining / megacore,
    8-aligned th_src (aligned dynamic sublane halo slices), largest tile that
    fits the per-tile VMEM budget.
    """
    out_h = src_rows * s_h

    def tile_bytes(th):
        m = th * out_w
        th_s = th // s_h
        b = (th_s + 2) * (out_w + 2) * cin * 2            # halo source slice (bf16)
        b += (th + 2) * (out_w + 2) * cin * 2             # upsampled tile value (bf16)
        if fold_taps:
            b += 2 * m * KH * KW * cin * 2                # im2col slabs + concat (bf16)
        else:
            b += 2 * m * cin * 2                          # live per-tap LHS slabs (bf16)
        b += 2 * m * cout * 4                             # f32 acc + transposed copy
        b += 2 * m * cout * 4                             # double-buffered out block
        return b

    cands = []
    for d in range(1, src_rows + 1):
        if src_rows % d:
            continue
        th = d * s_h
        if (th * out_w) % 128 != 0 and th != out_h:
            continue
        cands.append(d)
    if not cands:
        cands = [src_rows]

    fitting = [d for d in cands if tile_bytes(d * s_h) <= budget_bytes]
    if not fitting:
        fitting = [min(cands)]                            # best effort

    def rank(d):
        th = d * s_h
        return ((out_h // th) >= min_row_tiles,           # pipeline / megacore steps
                d % 8 == 0 or d == src_rows,              # 8-aligned halo slices
                th)                                       # then: biggest tile
    return max(fitting, key=rank) * s_h


def upconv2d_forward(x_nchw, weight, shape):
    """UpConv2d.forward: nearest upsample to `shape`, Conv2d(3x3, stride=1,
    padding=1, bias=False), LeakyReLU(0.1).

    x_nchw : (N, Cin, H, W) float32
    weight : (Cout, Cin, KH, KW) float32 (PyTorch conv weight layout)
    shape  : (out_H, out_W)
    returns: (N, Cout, out_H, out_W) float32
    """
    out_h, out_w = int(shape[0]), int(shape[1])
    n, cin, h, w = x_nchw.shape
    cout = weight.shape[0]

    # NHWC, bf16 activations (MXU native; f32 accumulation happens in-kernel).
    x_nhwc = jnp.transpose(x_nchw, (0, 2, 3, 1)).astype(jnp.bfloat16)

    # --- nearest upsample along W on the SMALL source (broadcast, no gather) ---
    if out_w % w == 0 and out_w >= w:
        s_w = out_w // w
        src = (x_nhwc if s_w == 1 else
               jnp.broadcast_to(x_nhwc[:, :, :, None, :],
                                (n, h, w, s_w, cin)).reshape(n, h, out_w, cin))
    else:
        col_idx = (jnp.arange(out_w) * w) // out_w         # PyTorch 'nearest' index
        src = x_nhwc[:, :, col_idx, :]

    # --- nearest upsample along H is fused into the kernel for integer scale ---
    if out_h % h == 0 and out_h >= h:
        s_h = out_h // h
    else:
        row_idx = (jnp.arange(out_h) * h) // out_h
        src = src[:, row_idx]
        s_h = 1
    src_rows = src.shape[1]

    # 1 px zero pad on the (still small) source: the padded rows/cols survive
    # the in-kernel upsample as the conv's zero padding and the tile halos.
    src_pad = jnp.pad(src, ((0, 0), (1, 1), (1, 1), (0, 0)))

    # conv weight -> bf16, layout chosen per contraction strategy
    fold_taps = (KH * KW * cin) <= 256
    w_hwio = jnp.transpose(weight, (2, 3, 1, 0)).astype(jnp.bfloat16)  # (KH,KW,Cin,Cout)
    if fold_taps:
        w_k = w_hwio.reshape(KH * KW * cin, cout)
        w_block = (KH * KW * cin, cout)
        w_imap = lambda b, t: (0, 0)
    else:
        w_k = w_hwio.reshape(KH * KW, cin, cout)
        w_block = (KH * KW, cin, cout)
        w_imap = lambda b, t: (0, 0, 0)

    # ---- per-generation VMEM budget and row-tile size ----------------------
    vmem_cap = _vmem_capacity_bytes()
    vmem_limit = (32 << 20) if vmem_cap <= (64 << 20) else (64 << 20)
    src_block_bytes = (src_rows + 2) * (out_w + 2) * cin * 2           # bf16
    w_bytes = KH * KW * cin * cout * 2
    # Single-buffer the grid-invariant source / weight blocks only when double
    # buffering them would cost real VMEM; tiny blocks keep the default.
    single_buffer = (hasattr(pl, "Buffered")
                     and 2 * (src_block_bytes + w_bytes) > (8 << 20))
    resident = (1 if single_buffer else 2) * (src_block_bytes + w_bytes)
    budget = max(vmem_limit - resident - (4 << 20), 1 << 20)

    th = _pick_row_tile(src_rows, s_h, out_w, cin, cout, budget, fold_taps)
    n_row_tiles = out_h // th

    flops = 2 * n * out_h * out_w * KH * KW * cin * cout
    bytes_accessed = (src_pad.size * 2 + w_k.size * 2
                      + n * cout * out_h * out_w * 4)
    cost = pl.CostEstimate(flops=flops, transcendentals=0,
                           bytes_accessed=bytes_accessed)

    kernel = functools.partial(_upconv_kernel, s_h=s_h, out_w=out_w,
                               fold_taps=fold_taps)

    def run(use_single_buffer):
        def inv_spec(shape_, imap):
            if use_single_buffer:
                return pl.BlockSpec(shape_, imap, pipeline_mode=pl.Buffered(1))
            return pl.BlockSpec(shape_, imap)

        return pl.pallas_call(
            kernel,
            out_shape=jax.ShapeDtypeStruct((n, cout, out_h * out_w), jnp.float32),
            grid_spec=pltpu.PrefetchScalarGridSpec(
                num_scalar_prefetch=0,
                grid=(n, n_row_tiles),
                in_specs=[
                    # whole padded source per batch element: block index does
                    # not depend on the row-tile axis -> fetched once per batch
                    # and reused across row tiles.
                    inv_spec((1, src_rows + 2, out_w + 2, cin),
                             lambda b, t: (b, 0, 0, 0)),
                    inv_spec(w_block, w_imap),
                ],
                out_specs=pl.BlockSpec((1, cout, th * out_w),
                                       lambda b, t: (b, 0, t)),
            ),
            compiler_params=pltpu.CompilerParams(
                dimension_semantics=("parallel", "parallel"),
                vmem_limit_bytes=vmem_limit),
            cost_estimate=cost,
        )(src_pad, w_k)

    if single_buffer:
        try:
            out_flat = run(True)
        except Exception:
            # older jax without BlockSpec pipeline_mode / pl.Buffered support
            out_flat = run(False)
    else:
        out_flat = run(False)

    # channel-major flat rows -> NCHW is a free reshape (no transpose).
    return out_flat.reshape(n, cout, out_h, out_w)


def _reference(x_nchw, weight, shape):
    """Pure-JAX/XLA f32 reference for the same forward pass."""
    n, c, h, w = x_nchw.shape
    out_h, out_w = shape
    row_idx = (jnp.arange(out_h) * h) // out_h
    col_idx = (jnp.arange(out_w) * w) // out_w
    up = x_nchw[:, :, row_idx, :][:, :, :, col_idx]
    conv = jax.lax.conv_general_dilated(
        up, weight, window_strides=(1, 1), padding=((1, 1), (1, 1)),
        dimension_numbers=("NCHW", "OIHW", "NCHW"))
    return jnp.where(conv >= 0, conv, NEG_SLOPE * conv)


if __name__ == "__main__":
    key = jax.random.PRNGKey(0)
    k1, k2, k3, k4 = jax.random.split(key, 4)

    # bf16 matmul inputs with f32 accumulation -> compare to the f32 reference
    # at bf16-appropriate tolerances.
    ATOL = 5e-2
    RTOL = 5e-2

    # --- test 1: small Cin (folded-im2col path), 2x nearest upsample --------
    N, Cin, H, W, Cout = 2, 4, 8, 8, 8
    x = jax.random.normal(k1, (N, Cin, H, W), dtype=jnp.float32)
    bound = (6.0 / (Cin * KH * KW)) ** 0.5
    weight = jax.random.uniform(k2, (Cout, Cin, KH, KW),
                                minval=-bound, maxval=bound, dtype=jnp.float32)

    out = jax.block_until_ready(upconv2d_forward(x, weight, (16, 16)))
    ref = _reference(x, weight, (16, 16))
    assert out.shape == (N, Cout, 16, 16), out.shape
    err = float(jnp.max(jnp.abs(out - ref)))
    assert jnp.allclose(out, ref, atol=ATOL, rtol=RTOL), err

    # --- test 2: non-integer H scale (gather fallback) + 3x W scale ---------
    out2 = jax.block_until_ready(upconv2d_forward(x, weight, (12, 24)))
    ref2 = _reference(x, weight, (12, 24))
    err2 = float(jnp.max(jnp.abs(out2 - ref2)))
    assert out2.shape == (N, Cout, 12, 24), out2.shape
    assert jnp.allclose(out2, ref2, atol=ATOL, rtol=RTOL), err2

    # --- test 3: larger Cin -> per-tap accumulating-matmul path -------------
    Cin2, Cout2 = 128, 8
    x2 = jax.random.normal(k3, (N, Cin2, H, W), dtype=jnp.float32)
    bound2 = (6.0 / (Cin2 * KH * KW)) ** 0.5
    weight2 = jax.random.uniform(k4, (Cout2, Cin2, KH, KW),
                                 minval=-bound2, maxval=bound2,
                                 dtype=jnp.float32)
    out3 = jax.block_until_ready(upconv2d_forward(x2, weight2, (16, 16)))
    ref3 = _reference(x2, weight2, (16, 16))
    err3 = float(jnp.max(jnp.abs(out3 - ref3)))
    assert out3.shape == (N, Cout2, 16, 16), out3.shape
    assert jnp.allclose(out3, ref3, atol=ATOL, rtol=RTOL), err3

    print("KERNEL_OK")
</pallas_src>

<mosaic_0001>
module attributes {stable_mosaic.version = 11 : i64} {
  func.func @_upconv_kernel(%arg0: i32, %arg1: i32, %arg2: memref<1x10x18x4xbf16, #tpu.memory_space<vmem>>, %arg3: memref<36x8xbf16, #tpu.memory_space<vmem>>, %arg4: memref<1x8x256xf32, #tpu.memory_space<vmem>>) attributes {dimension_semantics = [#tpu.dimension_semantics<parallel>, #tpu.dimension_semantics<parallel>], iteration_bounds = array<i64: 2, 1>, scalar_prefetch = 0 : i64, scratch_operands = 0 : i64, tpu.core_type = #tpu.core_type<tc>, window_params = [{transform_indices = @transform_0, window_bounds = array<i64: 1, 10, 18, 4>}, {pipeline_mode = #tpu.pipeline_mode<synchronous>, transform_indices = @transform_1, window_bounds = array<i64: 36, 8>}, {transform_indices = @transform_2, window_bounds = array<i64: 1, 8, 256>}]} {
    %c8_i32 = arith.constant 8 : i32
    %0 = arith.muli %arg1, %c8_i32 : i32
    %1 = tpu.assume_multiple %0, 8 : i32
    %c0 = arith.constant 0 : index
    %2 = arith.index_cast %1 : i32 to index
    %c0_0 = arith.constant 0 : index
    %c0_1 = arith.constant 0 : index
    %3 = vector.load %arg2[%c0, %2, %c0_0, %c0_1] : memref<1x10x18x4xbf16, #tpu.memory_space<vmem>>, vector<1x10x18x4xbf16>
    %4 = vector.shape_cast %3 : vector<1x10x18x4xbf16> to vector<10x18x4xbf16>
    %5 = vector.extract_strided_slice %4 {offsets = [1, 0, 0], sizes = [8, 18, 4], strides = [1, 1, 1]} : vector<10x18x4xbf16> to vector<8x18x4xbf16>
    %6 = vector.shape_cast %5 : vector<8x18x4xbf16> to vector<8x1x18x4xbf16>
    %7 = vector.shape_cast %6 : vector<8x1x18x4xbf16> to vector<8x1x18x4xbf16>
    %8 = vector.broadcast %7 : vector<8x1x18x4xbf16> to vector<8x2x18x4xbf16>
    %9 = vector.shape_cast %8 : vector<8x2x18x4xbf16> to vector<16x18x4xbf16>
    %10 = vector.extract_strided_slice %4 {offsets = [0, 0, 0], sizes = [1, 18, 4], strides = [1, 1, 1]} : vector<10x18x4xbf16> to vector<1x18x4xbf16>
    %11 = vector.extract_strided_slice %4 {offsets = [9, 0, 0], sizes = [1, 18, 4], strides = [1, 1, 1]} : vector<10x18x4xbf16> to vector<1x18x4xbf16>
    %12 = tpu.concatenate %10, %9, %11 in 0 : vector<1x18x4xbf16>, vector<16x18x4xbf16>, vector<1x18x4xbf16> -> vector<18x18x4xbf16>
    %13 = vector.extract_strided_slice %12 {offsets = [0, 0, 0], sizes = [16, 16, 4], strides = [1, 1, 1]} : vector<18x18x4xbf16> to vector<16x16x4xbf16>
    %14 = vector.shape_cast %13 : vector<16x16x4xbf16> to vector<256x4xbf16>
    %15 = vector.extract_strided_slice %12 {offsets = [0, 1, 0], sizes = [16, 16, 4], strides = [1, 1, 1]} : vector<18x18x4xbf16> to vector<16x16x4xbf16>
    %16 = vector.shape_cast %15 : vector<16x16x4xbf16> to vector<256x4xbf16>
    %17 = vector.extract_strided_slice %12 {offsets = [0, 2, 0], sizes = [16, 16, 4], strides = [1, 1, 1]} : vector<18x18x4xbf16> to vector<16x16x4xbf16>
    %18 = vector.shape_cast %17 : vector<16x16x4xbf16> to vector<256x4xbf16>
    %19 = vector.extract_strided_slice %12 {offsets = [1, 0, 0], sizes = [16, 16, 4], strides = [1, 1, 1]} : vector<18x18x4xbf16> to vector<16x16x4xbf16>
    %20 = vector.shape_cast %19 : vector<16x16x4xbf16> to vector<256x4xbf16>
    %21 = vector.extract_strided_slice %12 {offsets = [1, 1, 0], sizes = [16, 16, 4], strides = [1, 1, 1]} : vector<18x18x4xbf16> to vector<16x16x4xbf16>
    %22 = vector.shape_cast %21 : vector<16x16x4xbf16> to vector<256x4xbf16>
    %23 = vector.extract_strided_slice %12 {offsets = [1, 2, 0], sizes = [16, 16, 4], strides = [1, 1, 1]} : vector<18x18x4xbf16> to vector<16x16x4xbf16>
    %24 = vector.shape_cast %23 : vector<16x16x4xbf16> to vector<256x4xbf16>
    %25 = vector.extract_strided_slice %12 {offsets = [2, 0, 0], sizes = [16, 16, 4], strides = [1, 1, 1]} : vector<18x18x4xbf16> to vector<16x16x4xbf16>
    %26 = vector.shape_cast %25 : vector<16x16x4xbf16> to vector<256x4xbf16>
    %27 = vector.extract_strided_slice %12 {offsets = [2, 1, 0], sizes = [16, 16, 4], strides = [1, 1, 1]} : vector<18x18x4xbf16> to vector<16x16x4xbf16>
    %28 = vector.shape_cast %27 : vector<16x16x4xbf16> to vector<256x4xbf16>
    %29 = vector.extract_strided_slice %12 {offsets = [2, 2, 0], sizes = [16, 16, 4], strides = [1, 1, 1]} : vector<18x18x4xbf16> to vector<16x16x4xbf16>
    %30 = vector.shape_cast %29 : vector<16x16x4xbf16> to vector<256x4xbf16>
    %31 = tpu.concatenate %14, %16, %18, %20, %22, %24, %26, %28, %30 in 1 : vector<256x4xbf16>, vector<256x4xbf16>, vector<256x4xbf16>, vector<256x4xbf16>, vector<256x4xbf16>, vector<256x4xbf16>, vector<256x4xbf16>, vector<256x4xbf16>, vector<256x4xbf16> -> vector<256x36xbf16>
    %c0_2 = arith.constant 0 : index
    %c0_3 = arith.constant 0 : index
    %32 = vector.load %arg3[%c0_2, %c0_3] : memref<36x8xbf16, #tpu.memory_space<vmem>>, vector<36x8xbf16>
    %cst = arith.constant dense<0.000000e+00> : vector<256x8xf32>
    %33 = tpu.matmul %31, %32, %cst {dimension_numbers = #tpu.dot_dimension_numbers<[1], [0], [0], [1], [0, 0, 1, 1], [], []>} : vector<256x36xbf16>, vector<36x8xbf16>, vector<256x8xf32> -> vector<256x8xf32>
    %cst_4 = arith.constant 0.000000e+00 : f32
    %34 = vector.broadcast %cst_4 : f32 to vector<256x8xf32>
    %35 = arith.cmpf oge, %33, %34 : vector<256x8xf32>
    %cst_5 = arith.constant 1.000000e-01 : f32
    %36 = vector.broadcast %cst_5 : f32 to vector<256x8xf32>
    %37 = arith.mulf %36, %33 : vector<256x8xf32>
    %38 = arith.select %35, %33, %37 : vector<256x8xi1>, vector<256x8xf32>
    %39 = tpu.transpose %38, [1, 0] : vector<256x8xf32> -> vector<8x256xf32>
    %c0_6 = arith.constant 0 : index
    %c0_7 = arith.constant 0 : index
    %c0_8 = arith.constant 0 : index
    %40 = vector.load %arg4[%c0_6, %c0_7, %c0_8] : memref<1x8x256xf32, #tpu.memory_space<vmem>>, vector<1x8x256xf32>
    %41 = vector.shape_cast %40 : vector<1x8x256xf32> to vector<8x256xf32>
    %42 = vector.shape_cast %39 : vector<8x256xf32> to vector<1x8x256xf32>
    tpu.vector_store %arg4[%c0_6, %c0_7, %c0_8], %42 {strides = array<i32>} : memref<1x8x256xf32, #tpu.memory_space<vmem>>, vector<1x8x256xf32>,
    return
  }
  func.func @transform_0(%arg0: i32, %arg1: i32) -> (i32, i32, i32, i32) {
    %c0_i32 = arith.constant 0 : i32
    %c0_i32_0 = arith.constant 0 : i32
    %c0_i32_1 = arith.constant 0 : i32
    %c0_i32_2 = arith.constant 0 : i32
    return %arg0, %c0_i32, %c0_i32_0, %c0_i32_1 : i32, i32, i32, i32
  }
  func.func @transform_1(%arg0: i32, %arg1: i32) -> (i32, i32) {
    %c0_i32 = arith.constant 0 : i32
    %c0_i32_0 = arith.constant 0 : i32
    %c0_i32_1 = arith.constant 0 : i32
    return %c0_i32, %c0_i32_0 : i32, i32
  }
  func.func @transform_2(%arg0: i32, %arg1: i32) -> (i32, i32, i32) {
    %c0_i32 = arith.constant 0 : i32
    %c0_i32_0 = arith.constant 0 : i32
    return %arg0, %c0_i32, %arg1 : i32, i32, i32
  }
}

</mosaic_0001>

<llo_original>
// kernel: tpu_custom_call.1
$region0: #{tpu_custom_call.1}
  #allocation0 [shape = 'u32[]', space=smem, size = 0x4, offset = 0x4, fixed_abs, tag = 'smem constant byte address 0x4 - core index']
  #allocation1 [shape = 'u32[144,128]{1,0:T(1,128)}', space=vmem, size = 0x12000, scoped, tag = 'internal scratch']
  %s0 = inlined_call_operand.vmem [shape: bf16[2,10,18,4], index: 0, kind: input, shape index: {}]
  %s1 = inlined_call_operand.vmem [shape: bf16[36,8], index: 1, kind: input, shape index: {}]
  %s2 = inlined_call_operand.hbm [shape: f32[2,8,256], index: 2, kind: output, shape index: {}]
  %s3 = sld [smem:[#allocation0]]
  $region41: #{tpu_custom_call.1} parent=0
    _
  %s5 = ssub.s32 1, %s3
  %s6 = scalar_select 0, %s5, %s3
  $region1: #{tpu_custom_call.1} parent=0
    #allocation2 [shape = 'u8[16384]{0}', space=vmem, size = 0x4000, scoped, tag = 'output window, operand 0']
    #allocation3 [shape = 's32[2]{0}', space=sflag, size = 0x8, scoped, tag = 'scoped memory for tpu_custom_call.1']
    %7 = vsyncpa [#allocation3], 0
    %s8 = scalar_lea.sflag [#allocation3], 1
    %9 = vsyncpa %s8, 0
    loop: start=0, step=1, limit=4
    $region2: #{tpu_custom_call.1} parent=1 // loop_pre_header
      _
    $region3: #{tpu_custom_call.1} parent=1 // loop_header
      %s11 = sphi 0, %s15
      %p12 = scmp.ge.s32.totalorder %s11, 4
      %s18 = sphi 0, %s30
      %s19 = sphi 0, %s26
      %s20 = sphi 0, %s18
      %s21 = sphi 0, %s19
      %s22 = sphi 0, %s20
      %s23 = sphi 0, %s21
      %s33 = sphi 0, %s35
      %s36 = sphi 0, %s33
      %s37 = sphi 0, %s36
      %s53 = sphi 0, %s37
      %s57 = sphi 0, %s57
      %s59 = sphi 0, %s57
      %s60 = sphi 0, %s59
      %s74 = sphi 0, %s60
      %s82 = sphi 0, %s84
      %s85 = sphi 0, %s82
      %s86 = sphi 0, %s85
      %s102 = sphi 0, %s86
    $region4: #{tpu_custom_call.1} parent=1 // loop_header_branch
      %14 = sbr.rel (%p12) target = $region8
    $region5: #{tpu_custom_call.1} parent=1 // loop_body
      %s16 = ssub.s32 %s11, 1
      %s17 = ssub.s32 %s11, 2
      %s24 = sadd.s32 1, %s19
      %p25 = scmp.ge.s32.totalorder %s24, 1
      %s26 = scalar_select %p25, 0, %s24
      %s27 = sadd.s32 1, %s18
      %s28 = scalar_select %p25, %s27, %s18
      %p29 = scmp.ge.s32.totalorder %s28, 2
      %s30 = scalar_select %p29, 0, %s28
      %s31 = ssub.s32 %s18, %s30
      %p32 = scmp.eq.s32.totalorder %s31, 0
      %s34 = sadd.s32 %s33, 1
      %s35 = scalar_select %p32, %s33, %s34
      %p38 = pneg %p32
      %p39 = scmp.eq.s32.totalorder %s11, 1
      %p40 = por %p38, %p39
      %p41 = scmp.ne.s32.totalorder %s33, %s36
      %p42 = scmp.eq.s32.totalorder %s11, 0
      %p43 = por %p41, %p42
      %p44 = scmp.ne.s32.totalorder %s33, %s36
      %p45 = scmp.eq.s32.totalorder %s16, 1
      %p46 = por %p44, %p45
      %p47 = scmp.ne.s32.totalorder %s36, %s37
      %p48 = scmp.eq.s32.totalorder %s16, 0
      %p49 = por %p47, %p48
      %p50 = scmp.ne.s32.totalorder %s36, %s37
      %p51 = scmp.eq.s32.totalorder %s17, 1
      %p52 = por %p50, %p51
      %p54 = scmp.ne.s32.totalorder %s37, %s53
      %p55 = scmp.eq.s32.totalorder %s17, 0
      %p56 = por %p54, %p55
      %s58 = sadd.s32 %s57, 1
      %p61 = scmp.eq.s32.totalorder %s11, 1
      %p62 = scmp.ne.s32.totalorder %s57, %s59
      %p63 = scmp.eq.s32.totalorder %s11, 0
      %p64 = por %p62, %p63
      %p65 = scmp.ne.s32.totalorder %s57, %s59
      %p66 = scmp.eq.s32.totalorder %s16, 1
      %p67 = por %p65, %p66
      %p68 = scmp.ne.s32.totalorder %s59, %s60
      %p69 = scmp.eq.s32.totalorder %s16, 0
      %p70 = por %p68, %p69
      %p71 = scmp.ne.s32.totalorder %s59, %s60
      %p72 = scmp.eq.s32.totalorder %s17, 1
      %p73 = por %p71, %p72
      %p75 = scmp.ne.s32.totalorder %s60, %s74
      %p76 = scmp.eq.s32.totalorder %s17, 0
      %p77 = por %p75, %p76
      %s78 = ssub.s32 %s18, %s30
      %s79 = ssub.s32 %s19, %s26
      %s80 = sor.u32 %s78, %s79
      %p81 = scmp.eq.s32.totalorder %s80, 0
      %s83 = sadd.s32 %s82, 1
      %s84 = scalar_select %p81, %s82, %s83
      %p87 = pneg %p81
      %p88 = scmp.eq.s32.totalorder %s11, 1
      %p89 = por %p87, %p88
      %p90 = scmp.ne.s32.totalorder %s82, %s85
      %p91 = scmp.eq.s32.totalorder %s11, 0
      %p92 = por %p90, %p91
      %p93 = scmp.ne.s32.totalorder %s82, %s85
      %p94 = scmp.eq.s32.totalorder %s16, 1
      %p95 = por %p93, %p94
      %p96 = scmp.ne.s32.totalorder %s85, %s86
      %p97 = scmp.eq.s32.totalorder %s16, 0
      %p98 = por %p96, %p97
      %p99 = scmp.ne.s32.totalorder %s85, %s86
      %p100 = scmp.eq.s32.totalorder %s17, 1
      %p101 = por %p99, %p100
      %p103 = scmp.ne.s32.totalorder %s86, %s102
      %p104 = scmp.eq.s32.totalorder %s17, 0
      %p105 = por %p103, %p104
      %p106 = scmp.le.s32.totalorder 1, %s11
      %p107 = scmp.lt.s32.totalorder %s11, 3
      %p108 = pnand %p106, %p107
      %p109 = pneg %p108
      // Predicated region
      $region9: #{tpu_custom_call.1} parent=5 // pred_check
        _
      $region10: #{tpu_custom_call.1} parent=5 // pred_check_branch
        %111 = sbr.rel (%p108) target = $region12
      $region11: #{tpu_custom_call.1} parent=5 // pred_region
        %s112 = ssub.s32 %s11, 1
        // Predicated region
        $region13: #{tpu_custom_call.1} parent=11 // pred_check
          %p113 = pneg %p70
        $region14: #{tpu_custom_call.1} parent=11 // pred_check_branch
          %115 = sbr.rel (%p113) target = $region16
        $region15: #{tpu_custom_call.1} parent=11 // pred_region
          _
        $region16: #{tpu_custom_call.1} parent=11 // pred_fallthru
          _
      $region12: #{tpu_custom_call.1} parent=5 // pred_fallthru
        _
      %p116 = scmp.lt.s32.totalorder %s11, 2
      // Predicated region
      $region17: #{tpu_custom_call.1} parent=5 // pred_check
        %p117 = pneg %p116
      $region18: #{tpu_custom_call.1} parent=5 // pred_check_branch
        %119 = sbr.rel (%p117) target = $region20
      $region19: #{tpu_custom_call.1} parent=5 // pred_region
        // Predicated region
        $region21: #{tpu_custom_call.1} parent=19 // pred_check
          %p120 = pneg %p43
        $region22: #{tpu_custom_call.1} parent=19 // pred_check_branch
          %122 = sbr.rel (%p120) target = $region24
        $region23: #{tpu_custom_call.1} parent=19 // pred_region
          %p123 = scmp.lt.s32.totalorder %s18, 1
          %s124 = scalar_select %p123, %s18, 1
          %s125 = smul.addr %s124, 30
          %s126 = smul.addr %s125, 4
          %s127 = scalar_lea.vmem %s0, %s126
        $region24: #{tpu_custom_call.1} parent=19 // pred_fallthru
          _
      $region20: #{tpu_custom_call.1} parent=5 // pred_fallthru
        _
      %p128 = scmp.le.s32.totalorder 1, %s11
      %p129 = scmp.lt.s32.totalorder %s11, 3
      %p130 = pnand %p128, %p129
      %p131 = pneg %p130
      // Predicated region
      $region25: #{tpu_custom_call.1} parent=5 // pred_check
        _
      $region26: #{tpu_custom_call.1} parent=5 // pred_check_branch
        %133 = sbr.rel (%p130) target = $region28
      $region27: #{tpu_custom_call.1} parent=5 // pred_region
        %s134 = ssub.s32 %s11, 1
        %p135 = scmp.lt.s32.totalorder %s20, 1
        %s136 = scalar_select %p135, %s20, 1
        %s137 = smul.addr %s136, 30
        %s138 = smul.addr %s137, 4
        %s139 = scalar_lea.vmem %s0, %s138
        %p140 = pneg %p49
        %p141 = pneg %p46
        %p142 = pneg %p70
        %p143 = pneg %p67
        %p144 = pneg %p98
        %p145 = pneg %p95
        %s146 = sand.u32 %s85, 1
        %s147 = scalar_lea.sflag [#allocation3], %s146
        %s148 = sand.u32 %s85, 1
        %s149 = smul.addr %s148, 16
        %s150 = scalar_lea.vmem [#allocation2], %s149
        %p151 = scmp.lt.s32.totalorder %s20, 1
        %s152 = scalar_select %p151, %s20, 1
        %s153 = smul.addr %s152, 30
        %s154 = smul.addr %s153, 4
        %s155 = scalar_lea.vmem %s0, %s154
        %s156 = smul.u32 2, %s21
        %s158 = smul.u32 %s21, 8
        %s159 = smul.u32 %s158, 3
        %s160 = smul.addr %s159, 4
        %s161 = scalar_lea.vmem %s155, %s160
        %v162 = vld [vmem:[%s161] sm:$0xf]
        %v163 = vld [vmem:[%s161 + $0x4] sm:$0xf]
        %v164 = vld [vmem:[%s161 + $0x8] sm:$0x1]
        %v165 = vld [vmem:[%s161 + $0xc] sm:$0xf]
        %v166 = vld [vmem:[%s161 + $0x10] sm:$0xf]
        %v167 = vld [vmem:[%s161 + $0x14] sm:$0x1]
        %v168 = vld [vmem:[%s161 + $0x18] sm:$0xf]
        %v169 = vld [vmem:[%s161 + $0x1c] sm:$0xf]
        %v170 = vld [vmem:[%s161 + $0x20] sm:$0x1]
        %v171 = vld [vmem:[%s161 + $0x24] sm:$0xf]
        %v172 = vld [vmem:[%s161 + $0x28] sm:$0xf]
        %v173 = vld [vmem:[%s161 + $0x2c] sm:$0x1]
        %v174 = vld [vmem:[%s161 + $0x30] sm:$0xf]
        %v175 = vld [vmem:[%s161 + $0x34] sm:$0xf]
        %v176 = vld [vmem:[%s161 + $0x38] sm:$0x1]
        %v177 = vld [vmem:[%s161 + $0x3c] sm:$0xf]
        %v178 = vld [vmem:[%s161 + $0x40] sm:$0xf]
        %v179 = vld [vmem:[%s161 + $0x44] sm:$0x1]
        %v180 = vld [vmem:[%s161 + $0x48] sm:$0xf]
        %v181 = vld [vmem:[%s161 + $0x4c] sm:$0xf]
        %v182 = vld [vmem:[%s161 + $0x50] sm:$0x1]
        %v183 = vld [vmem:[%s161 + $0x54] sm:$0xf]
        %v184 = vld [vmem:[%s161 + $0x58] sm:$0xf]
        %v185 = vld [vmem:[%s161 + $0x5c] sm:$0x1]
        %v186 = vld [vmem:[%s161 + $0x60] sm:$0xf]
        %v187 = vld [vmem:[%s161 + $0x64] sm:$0xf]
        %v188 = vld [vmem:[%s161 + $0x68] sm:$0x1]
        %v189 = vld [vmem:[%s161 + $0x6c] sm:$0xf]
        %v190 = vld [vmem:[%s161 + $0x70] sm:$0xf]
        %v191 = vld [vmem:[%s161 + $0x74] sm:$0x1]
        %vm192 = vsmask.f32 3328
        %vm193 = vsmask.f32 7440
        %vm194 = vmor %vm192, %vm193
        %v196 = vshrl.u32 %v162, 16
        %v198 = vrot.slane %v196, 4
        %v199 = vshll.u32 %v162, 16
        %v201 = vrot.slane %v199, 5
        %v202 = vor.u32 %v198, %v201
        %v203 = vrot.slane %v202, 4
        %v205 = vshll.u32 %v163, 16
        %v207 = vrot.slane %v205, 5
        %v208 = vsel %vm194, %v203, %v207
        %v209 = vshrl.u32 %v163, 16
        %v211 = vrot.slane %v209, 4
        %v212 = vor.u32 %v211, %v207
        %v213 = vrot.slane %v212, 4
        %v215 = vshll.u32 %v164, 16
        %v217 = vrot.slane %v215, 5
        %v218 = vsel %vm194, %v213, %v217
        %v220 = vshrl.u32 %v165, 16
        %v222 = vrot.slane %v220, 4
        %v223 = vshll.u32 %v165, 16
        %v225 = vrot.slane %v223, 5
        %v226 = vor.u32 %v222, %v225
        %v227 = vrot.slane %v226, 4
        %v229 = vshll.u32 %v166, 16
        %v231 = vrot.slane %v229, 5
        %v232 = vsel %vm194, %v227, %v231
        %v233 = vshrl.u32 %v166, 16
        %v235 = vrot.slane %v233, 4
        %v236 = vor.u32 %v235, %v231
        %v237 = vrot.slane %v236, 4
        %v239 = vshll.u32 %v167, 16
        %v241 = vrot.slane %v239, 5
        %v242 = vsel %vm194, %v237, %v241
        %v244 = vshrl.u32 %v168, 16
        %v246 = vrot.slane %v244, 4
        %v247 = vshll.u32 %v168, 16
        %v249 = vrot.slane %v247, 5
        %v250 = vor.u32 %v246, %v249
        %v251 = vrot.slane %v250, 4
        %v253 = vshll.u32 %v169, 16
        %v255 = vrot.slane %v253, 5
        %v256 = vsel %vm194, %v251, %v255
        %v257 = vshrl.u32 %v169, 16
        %v259 = vrot.slane %v257, 4
        %v260 = vor.u32 %v259, %v255
        %v261 = vrot.slane %v260, 4
        %v263 = vshll.u32 %v170, 16
        %v265 = vrot.slane %v263, 5
        %v266 = vsel %vm194, %v261, %v265
        %v268 = vshrl.u32 %v171, 16
        %v270 = vrot.slane %v268, 4
        %v271 = vshll.u32 %v171, 16
        %v273 = vrot.slane %v271, 5
        %v274 = vor.u32 %v270, %v273
        %v275 = vrot.slane %v274, 4
        %v277 = vshll.u32 %v172, 16
        %v279 = vrot.slane %v277, 5
        %v280 = vsel %vm194, %v275, %v279
        %v281 = vshrl.u32 %v172, 16
        %v283 = vrot.slane %v281, 4
        %v284 = vor.u32 %v283, %v279
        %v285 = vrot.slane %v284, 4
        %v287 = vshll.u32 %v173, 16
        %v289 = vrot.slane %v287, 5
        %v290 = vsel %vm194, %v285, %v289
        %v292 = vshrl.u32 %v174, 16
        %v294 = vrot.slane %v292, 4
        %v295 = vshll.u32 %v174, 16
        %v297 = vrot.slane %v295, 5
        %v298 = vor.u32 %v294, %v297
        %v299 = vrot.slane %v298, 4
        %v301 = vshll.u32 %v175, 16
        %v303 = vrot.slane %v301, 5
        %v304 = vsel %vm194, %v299, %v303
        %v305 = vshrl.u32 %v175, 16
        %v307 = vrot.slane %v305, 4
        %v308 = vor.u32 %v307, %v303
        %v309 = vrot.slane %v308, 4
        %v311 = vshll.u32 %v176, 16
        %v313 = vrot.slane %v311, 5
        %v314 = vsel %vm194, %v309, %v313
        %v316 = vshrl.u32 %v177, 16
        %v318 = vrot.slane %v316, 4
        %v319 = vshll.u32 %v177, 16
        %v321 = vrot.slane %v319, 5
        %v322 = vor.u32 %v318, %v321
        %v323 = vrot.slane %v322, 4
        %v325 = vshll.u32 %v178, 16
        %v327 = vrot.slane %v325, 5
        %v328 = vsel %vm194, %v323, %v327
        %v329 = vshrl.u32 %v178, 16
        %v331 = vrot.slane %v329, 4
        %v332 = vor.u32 %v331, %v327
        %v333 = vrot.slane %v332, 4
        %v335 = vshll.u32 %v179, 16
        %v337 = vrot.slane %v335, 5
        %v338 = vsel %vm194, %v333, %v337
        %v340 = vshrl.u32 %v180, 16
        %v342 = vrot.slane %v340, 4
        %v343 = vshll.u32 %v180, 16
        %v345 = vrot.slane %v343, 5
        %v346 = vor.u32 %v342, %v345
        %v347 = vrot.slane %v346, 4
        %v349 = vshll.u32 %v181, 16
        %v351 = vrot.slane %v349, 5
        %v352 = vsel %vm194, %v347, %v351
        %v353 = vshrl.u32 %v181, 16
        %v355 = vrot.slane %v353, 4
        %v356 = vor.u32 %v355, %v351
        %v357 = vrot.slane %v356, 4
        %v359 = vshll.u32 %v182, 16
        %v361 = vrot.slane %v359, 5
        %v362 = vsel %vm194, %v357, %v361
        %v364 = vshrl.u32 %v183, 16
        %v366 = vrot.slane %v364, 4
        %v367 = vshll.u32 %v183, 16
        %v369 = vrot.slane %v367, 5
        %v370 = vor.u32 %v366, %v369
        %v371 = vrot.slane %v370, 4
        %v373 = vshll.u32 %v184, 16
        %v375 = vrot.slane %v373, 5
        %v376 = vsel %vm194, %v371, %v375
        %v377 = vshrl.u32 %v184, 16
        %v379 = vrot.slane %v377, 4
        %v380 = vor.u32 %v379, %v375
        %v381 = vrot.slane %v380, 4
        %v383 = vshll.u32 %v185, 16
        %v385 = vrot.slane %v383, 5
        %v386 = vsel %vm194, %v381, %v385
        %v388 = vshrl.u32 %v186, 16
        %v390 = vrot.slane %v388, 4
        %v391 = vshll.u32 %v186, 16
        %v393 = vrot.slane %v391, 5
        %v394 = vor.u32 %v390, %v393
        %v395 = vrot.slane %v394, 4
        %v397 = vshll.u32 %v187, 16
        %v399 = vrot.slane %v397, 5
        %v400 = vsel %vm194, %v395, %v399
        %v401 = vshrl.u32 %v187, 16
        %v403 = vrot.slane %v401, 4
        %v404 = vor.u32 %v403, %v399
        %v405 = vrot.slane %v404, 4
        %v407 = vshll.u32 %v188, 16
        %v409 = vrot.slane %v407, 5
        %v410 = vsel %vm194, %v405, %v409
        %vm438 = vcmask 1042432
        %vm439 = vcmask 1046532
        %vm440 = vmor %vm438, %vm439
        %v441 = vrot.slane %v162, 5
        %v442 = vrot.slane %v441, 4
        %v443 = vrot.slane %v163, 5
        %v444 = vsel %vm440, %v442, %v443
        %v445 = vrot.slane %v443, 4
        %v446 = vrot.slane %v164, 5
        %v447 = vsel %vm440, %v445, %v446
        %v448 = vrot.slane %v165, 5
        %v449 = vrot.slane %v448, 4
        %v450 = vrot.slane %v166, 5
        %v451 = vsel %vm440, %v449, %v450
        %v452 = vrot.slane %v450, 4
        %v453 = vrot.slane %v167, 5
        %v454 = vsel %vm440, %v452, %v453
        %v455 = vrot.slane %v168, 5
        %v456 = vrot.slane %v455, 4
        %v457 = vrot.slane %v169, 5
        %v458 = vsel %vm440, %v456, %v457
        %v459 = vrot.slane %v457, 4
        %v460 = vrot.slane %v170, 5
        %v461 = vsel %vm440, %v459, %v460
        %v462 = vrot.slane %v171, 5
        %v463 = vrot.slane %v462, 4
        %v464 = vrot.slane %v172, 5
        %v465 = vsel %vm440, %v463, %v464
        %v466 = vrot.slane %v464, 4
        %v467 = vrot.slane %v173, 5
        %v468 = vsel %vm440, %v466, %v467
        %v469 = vrot.slane %v174, 5
        %v470 = vrot.slane %v469, 4
        %v471 = vrot.slane %v175, 5
        %v472 = vsel %vm440, %v470, %v471
        %v473 = vrot.slane %v471, 4
        %v474 = vrot.slane %v176, 5
        %v475 = vsel %vm440, %v473, %v474
        %v476 = vrot.slane %v177, 5
        %v477 = vrot.slane %v476, 4
        %v478 = vrot.slane %v178, 5
        %v479 = vsel %vm440, %v477, %v478
        %v480 = vrot.slane %v478, 4
        %v481 = vrot.slane %v179, 5
        %v482 = vsel %vm440, %v480, %v481
        %v483 = vrot.slane %v180, 5
        %v484 = vrot.slane %v483, 4
        %v485 = vrot.slane %v181, 5
        %v486 = vsel %vm440, %v484, %v485
        %v487 = vrot.slane %v485, 4
        %v488 = vrot.slane %v182, 5
        %v489 = vsel %vm440, %v487, %v488
        %v490 = vrot.slane %v183, 5
        %v491 = vrot.slane %v490, 4
        %v492 = vrot.slane %v184, 5
        %v493 = vsel %vm440, %v491, %v492
        %v494 = vrot.slane %v492, 4
        %v495 = vrot.slane %v185, 5
        %v496 = vsel %vm440, %v494, %v495
        %v497 = vrot.slane %v186, 5
        %v498 = vrot.slane %v497, 4
        %v499 = vrot.slane %v187, 5
        %v500 = vsel %vm440, %v498, %v499
        %v501 = vrot.slane %v499, 4
        %v502 = vrot.slane %v188, 5
        %v503 = vsel %vm440, %v501, %v502
        %v505 = vshrl.u32 %v189, 16
        %v507 = vrot.slane %v505, 4
        %v508 = vshll.u32 %v189, 16
        %v510 = vrot.slane %v508, 5
        %v511 = vor.u32 %v507, %v510
        %v512 = vrot.slane %v511, 4
        %v514 = vshll.u32 %v190, 16
        %v516 = vrot.slane %v514, 5
        %v517 = vsel %vm194, %v512, %v516
        %v518 = vshrl.u32 %v190, 16
        %v520 = vrot.slane %v518, 4
        %v521 = vor.u32 %v520, %v516
        %v522 = vrot.slane %v521, 4
        %v524 = vshll.u32 %v191, 16
        %v526 = vrot.slane %v524, 5
        %v527 = vsel %vm194, %v522, %v526
        %v531 = vrot.slane %v189, 5
        %v532 = vrot.slane %v531, 4
        %v533 = vrot.slane %v190, 5
        %v534 = vsel %vm440, %v532, %v533
        %v535 = vrot.slane %v533, 4
        %v536 = vrot.slane %v191, 5
        %v537 = vsel %vm440, %v535, %v536
        %v538 = vunpack.c.l.b16 %v162
        %v539 = vunpack.c.l.b16 %v163
        %v540 = vunpack.c.l.b16 %v165
        %v541 = vunpack.c.l.b16 %v166
        %v542 = vunpack.c.l.b16 %v168
        %v543 = vunpack.c.l.b16 %v169
        %v544 = vunpack.c.l.b16 %v171
        %v545 = vunpack.c.l.b16 %v172
        %v546 = vunpack.c.l.b16 %v174
        %v547 = vunpack.c.l.b16 %v175
        %v548 = vunpack.c.l.b16 %v177
        %v549 = vunpack.c.l.b16 %v178
        %v550 = vunpack.c.l.b16 %v180
        %v551 = vunpack.c.l.b16 %v181
        %v552 = vunpack.c.l.b16 %v183
        %v553 = vunpack.c.l.b16 %v184
        %v554 = vunpack.c.l.b16 %v186
        %v555 = vunpack.c.l.b16 %v187
        %v556 = vpack.c.b16 %v539, %v538
        %v557 = vpack.c.b16 %v541, %v540
        %v558 = vpack.c.b16 %v543, %v542
        %v559 = vpack.c.b16 %v545, %v544
        %v560 = vpack.c.b16 %v547, %v546
        %v561 = vpack.c.b16 %v549, %v548
        %v562 = vpack.c.b16 %v551, %v550
        %v563 = vpack.c.b16 %v553, %v552
        %v564 = vpack.c.b16 %v555, %v554
        %v565 = vunpack.c.l.b16 %v208
        %v566 = vunpack.c.l.b16 %v218
        %v567 = vunpack.c.l.b16 %v232
        %v568 = vunpack.c.l.b16 %v242
        %v569 = vunpack.c.l.b16 %v256
        %v570 = vunpack.c.l.b16 %v266
        %v571 = vunpack.c.l.b16 %v280
        %v572 = vunpack.c.l.b16 %v290
        %v573 = vunpack.c.l.b16 %v304
        %v574 = vunpack.c.l.b16 %v314
        %v575 = vunpack.c.l.b16 %v328
        %v576 = vunpack.c.l.b16 %v338
        %v577 = vunpack.c.l.b16 %v352
        %v578 = vunpack.c.l.b16 %v362
        %v579 = vunpack.c.l.b16 %v376
        %v580 = vunpack.c.l.b16 %v386
        %v581 = vunpack.c.l.b16 %v400
        %v582 = vunpack.c.l.b16 %v410
        %v583 = vpack.c.b16 %v566, %v565
        %v584 = vpack.c.b16 %v568, %v567
        %v585 = vpack.c.b16 %v570, %v569
        %v586 = vpack.c.b16 %v572, %v571
        %v587 = vpack.c.b16 %v574, %v573
        %v588 = vpack.c.b16 %v576, %v575
        %v589 = vpack.c.b16 %v578, %v577
        %v590 = vpack.c.b16 %v580, %v579
        %v591 = vpack.c.b16 %v582, %v581
        %592 = vrot.lane.b32.xlu0 %v583, 4
        %v593 = vpop.permute.xlu0 %592
        %594 = vrot.lane.b32.xlu0 %v584, 4
        %v595 = vpop.permute.xlu0 %594
        %596 = vrot.lane.b32.xlu0 %v585, 4
        %v597 = vpop.permute.xlu0 %596
        %598 = vrot.lane.b32.xlu0 %v586, 4
        %v599 = vpop.permute.xlu0 %598
        %600 = vrot.lane.b32.xlu0 %v587, 4
        %v601 = vpop.permute.xlu0 %600
        %602 = vrot.lane.b32.xlu0 %v588, 4
        %v603 = vpop.permute.xlu0 %602
        %604 = vrot.lane.b32.xlu0 %v589, 4
        %v605 = vpop.permute.xlu0 %604
        %606 = vrot.lane.b32.xlu0 %v590, 4
        %v607 = vpop.permute.xlu0 %606
        %608 = vrot.lane.b32.xlu0 %v591, 4
        %v609 = vpop.permute.xlu0 %608
        %v610 = vunpack.c.l.b16 %v444
        %v611 = vunpack.c.l.b16 %v447
        %v612 = vunpack.c.l.b16 %v451
        %v613 = vunpack.c.l.b16 %v454
        %v614 = vunpack.c.l.b16 %v458
        %v615 = vunpack.c.l.b16 %v461
        %v616 = vunpack.c.l.b16 %v465
        %v617 = vunpack.c.l.b16 %v468
        %v618 = vunpack.c.l.b16 %v472
        %v619 = vunpack.c.l.b16 %v475
        %v620 = vunpack.c.l.b16 %v479
        %v621 = vunpack.c.l.b16 %v482
        %v622 = vunpack.c.l.b16 %v486
        %v623 = vunpack.c.l.b16 %v489
        %v624 = vunpack.c.l.b16 %v493
        %v625 = vunpack.c.l.b16 %v496
        %v626 = vunpack.c.l.b16 %v500
        %v627 = vunpack.c.l.b16 %v503
        %v628 = vpack.c.b16 %v611, %v610
        %v629 = vpack.c.b16 %v613, %v612
        %v630 = vpack.c.b16 %v615, %v614
        %v631 = vpack.c.b16 %v617, %v616
        %v632 = vpack.c.b16 %v619, %v618
        %v633 = vpack.c.b16 %v621, %v620
        %v634 = vpack.c.b16 %v623, %v622
        %v635 = vpack.c.b16 %v625, %v624
        %v636 = vpack.c.b16 %v627, %v626
        %637 = vrot.lane.b32.xlu0 %v628, 8
        %v638 = vpop.permute.xlu0 %637
        %639 = vrot.lane.b32.xlu0 %v629, 8
        %v640 = vpop.permute.xlu0 %639
        %641 = vrot.lane.b32.xlu0 %v630, 8
        %v642 = vpop.permute.xlu0 %641
        %643 = vrot.lane.b32.xlu0 %v631, 8
        %v644 = vpop.permute.xlu0 %643
        %645 = vrot.lane.b32.xlu0 %v632, 8
        %v646 = vpop.permute.xlu0 %645
        %647 = vrot.lane.b32.xlu0 %v633, 8
        %v648 = vpop.permute.xlu0 %647
        %649 = vrot.lane.b32.xlu0 %v634, 8
        %v650 = vpop.permute.xlu0 %649
        %651 = vrot.lane.b32.xlu0 %v635, 8
        %v652 = vpop.permute.xlu0 %651
        %653 = vrot.lane.b32.xlu0 %v636, 8
        %v654 = vpop.permute.xlu0 %653
        %655 = vrot.lane.b32.xlu0 %v557, 12
        %v656 = vpop.permute.xlu0 %655
        %657 = vrot.lane.b32.xlu0 %v558, 12
        %v658 = vpop.permute.xlu0 %657
        %659 = vrot.lane.b32.xlu0 %v559, 12
        %v660 = vpop.permute.xlu0 %659
        %661 = vrot.lane.b32.xlu0 %v560, 12
        %v662 = vpop.permute.xlu0 %661
        %663 = vrot.lane.b32.xlu0 %v561, 12
        %v664 = vpop.permute.xlu0 %663
        %665 = vrot.lane.b32.xlu0 %v562, 12
        %v666 = vpop.permute.xlu0 %665
        %667 = vrot.lane.b32.xlu0 %v563, 12
        %v668 = vpop.permute.xlu0 %667
        %669 = vrot.lane.b32.xlu0 %v564, 12
        %v670 = vpop.permute.xlu0 %669
        %671 = vrot.lane.b32.xlu0 %v584, 16
        %v672 = vpop.permute.xlu0 %671
        %673 = vrot.lane.b32.xlu0 %v585, 16
        %v674 = vpop.permute.xlu0 %673
        %675 = vrot.lane.b32.xlu0 %v586, 16
        %v676 = vpop.permute.xlu0 %675
        %677 = vrot.lane.b32.xlu0 %v587, 16
        %v678 = vpop.permute.xlu0 %677
        %679 = vrot.lane.b32.xlu0 %v588, 16
        %v680 = vpop.permute.xlu0 %679
        %681 = vrot.lane.b32.xlu0 %v589, 16
        %v682 = vpop.permute.xlu0 %681
        %683 = vrot.lane.b32.xlu0 %v590, 16
        %v684 = vpop.permute.xlu0 %683
        %685 = vrot.lane.b32.xlu0 %v591, 16
        %v686 = vpop.permute.xlu0 %685
        %687 = vrot.lane.b32.xlu0 %v629, 20
        %v688 = vpop.permute.xlu0 %687
        %689 = vrot.lane.b32.xlu0 %v630, 20
        %v690 = vpop.permute.xlu0 %689
        %691 = vrot.lane.b32.xlu0 %v631, 20
        %v692 = vpop.permute.xlu0 %691
        %693 = vrot.lane.b32.xlu0 %v632, 20
        %v694 = vpop.permute.xlu0 %693
        %695 = vrot.lane.b32.xlu0 %v633, 20
        %v696 = vpop.permute.xlu0 %695
        %697 = vrot.lane.b32.xlu0 %v634, 20
        %v698 = vpop.permute.xlu0 %697
        %699 = vrot.lane.b32.xlu0 %v635, 20
        %v700 = vpop.permute.xlu0 %699
        %701 = vrot.lane.b32.xlu0 %v636, 20
        %v702 = vpop.permute.xlu0 %701
        %v703 = vunpack.c.l.b16 %v189
        %v704 = vunpack.c.l.b16 %v190
        %v705 = vpack.c.b16 %v704, %v703
        %706 = vrot.lane.b32.xlu0 %v557, 24
        %v707 = vpop.permute.xlu0 %706
        %708 = vrot.lane.b32.xlu0 %v558, 24
        %v709 = vpop.permute.xlu0 %708
        %710 = vrot.lane.b32.xlu0 %v559, 24
        %v711 = vpop.permute.xlu0 %710
        %712 = vrot.lane.b32.xlu0 %v560, 24
        %v713 = vpop.permute.xlu0 %712
        %714 = vrot.lane.b32.xlu0 %v561, 24
        %v715 = vpop.permute.xlu0 %714
        %716 = vrot.lane.b32.xlu0 %v562, 24
        %v717 = vpop.permute.xlu0 %716
        %718 = vrot.lane.b32.xlu0 %v563, 24
        %v719 = vpop.permute.xlu0 %718
        %720 = vrot.lane.b32.xlu0 %v564, 24
        %v721 = vpop.permute.xlu0 %720
        %722 = vrot.lane.b32.xlu0 %v705, 24
        %v723 = vpop.permute.xlu0 %722
        %v724 = vunpack.c.l.b16 %v517
        %v725 = vunpack.c.l.b16 %v527
        %v726 = vpack.c.b16 %v725, %v724
        %727 = vrot.lane.b32.xlu0 %v584, 28
        %v728 = vpop.permute.xlu0 %727
        %729 = vrot.lane.b32.xlu0 %v585, 28
        %v730 = vpop.permute.xlu0 %729
        %731 = vrot.lane.b32.xlu0 %v586, 28
        %v732 = vpop.permute.xlu0 %731
        %733 = vrot.lane.b32.xlu0 %v587, 28
        %v734 = vpop.permute.xlu0 %733
        %735 = vrot.lane.b32.xlu0 %v588, 28
        %v736 = vpop.permute.xlu0 %735
        %737 = vrot.lane.b32.xlu0 %v589, 28
        %v738 = vpop.permute.xlu0 %737
        %739 = vrot.lane.b32.xlu0 %v590, 28
        %v740 = vpop.permute.xlu0 %739
        %741 = vrot.lane.b32.xlu0 %v591, 28
        %v742 = vpop.permute.xlu0 %741
        %743 = vrot.lane.b32.xlu0 %v726, 28
        %v744 = vpop.permute.xlu0 %743
        %v745 = vunpack.c.l.b16 %v534
        %v746 = vunpack.c.l.b16 %v537
        %v747 = vpack.c.b16 %v746, %v745
        %748 = vrot.lane.b32.xlu0 %v629, 32
        %v749 = vpop.permute.xlu0 %748
        %750 = vrot.lane.b32.xlu0 %v630, 32
        %v751 = vpop.permute.xlu0 %750
        %752 = vrot.lane.b32.xlu0 %v631, 32
        %v753 = vpop.permute.xlu0 %752
        %754 = vrot.lane.b32.xlu0 %v632, 32
        %v755 = vpop.permute.xlu0 %754
        %756 = vrot.lane.b32.xlu0 %v633, 32
        %v757 = vpop.permute.xlu0 %756
        %758 = vrot.lane.b32.xlu0 %v634, 32
        %v759 = vpop.permute.xlu0 %758
        %760 = vrot.lane.b32.xlu0 %v635, 32
        %v761 = vpop.permute.xlu0 %760
        %762 = vrot.lane.b32.xlu0 %v636, 32
        %v763 = vpop.permute.xlu0 %762
        %764 = vrot.lane.b32.xlu0 %v747, 32
        %v765 = vpop.permute.xlu0 %764
        %vm766 = vcmask 31744
        %v769 = vsel %vm766, %v556, %v593
        %v772 = vsel %vm766, %v557, %v595
        %v775 = vsel %vm766, %v558, %v597
        %v778 = vsel %vm766, %v559, %v599
        %v781 = vsel %vm766, %v560, %v601
        %v784 = vsel %vm766, %v561, %v603
        %v787 = vsel %vm766, %v562, %v605
        %v790 = vsel %vm766, %v563, %v607
        %v793 = vsel %vm766, %v564, %v609
        %vm794 = vcmask 64512
        %v796 = vsel %vm794, %v769, %v638
        %v798 = vsel %vm794, %v772, %v640
        %v800 = vsel %vm794, %v775, %v642
        %v802 = vsel %vm794, %v778, %v644
        %v804 = vsel %vm794, %v781, %v646
        %v806 = vsel %vm794, %v784, %v648
        %v808 = vsel %vm794, %v787, %v650
        %v810 = vsel %vm794, %v790, %v652
        %v812 = vsel %vm794, %v793, %v654
        %vm813 = vcmask 97280
        %v815 = vsel %vm813, %v796, %v656
        %v816 = vsel %vm813, %v798, %v656
        %v818 = vsel %vm813, %v798, %v658
        %v819 = vsel %vm813, %v800, %v658
        %v821 = vsel %vm813, %v800, %v660
        %v822 = vsel %vm813, %v802, %v660
        %v824 = vsel %vm813, %v802, %v662
        %v825 = vsel %vm813, %v804, %v662
        %v827 = vsel %vm813, %v804, %v664
        %v828 = vsel %vm813, %v806, %v664
        %v830 = vsel %vm813, %v806, %v666
        %v831 = vsel %vm813, %v808, %v666
        %v833 = vsel %vm813, %v808, %v668
        %v834 = vsel %vm813, %v810, %v668
        %v836 = vsel %vm813, %v810, %v670
        %v837 = vsel %vm813, %v812, %v670
        %vm838 = vcmask 130048
        %v840 = vsel %vm838, %v815, %v672
        %v841 = vsel %vm838, %v816, %v672
        %v843 = vsel %vm838, %v818, %v674
        %v844 = vsel %vm838, %v819, %v674
        %v846 = vsel %vm838, %v821, %v676
        %v847 = vsel %vm838, %v822, %v676
        %v849 = vsel %vm838, %v824, %v678
        %v850 = vsel %vm838, %v825, %v678
        %v852 = vsel %vm838, %v827, %v680
        %v853 = vsel %vm838, %v828, %v680
        %v855 = vsel %vm838, %v830, %v682
        %v856 = vsel %vm838, %v831, %v682
        %v858 = vsel %vm838, %v833, %v684
        %v859 = vsel %vm838, %v834, %v684
        %v861 = vsel %vm838, %v836, %v686
        %v862 = vsel %vm838, %v837, %v686
        %vm863 = vcmask 162816
        %v865 = vsel %vm863, %v840, %v688
        %v866 = vsel %vm863, %v841, %v688
        %v868 = vsel %vm863, %v843, %v690
        %v869 = vsel %vm863, %v844, %v690
        %v871 = vsel %vm863, %v846, %v692
        %v872 = vsel %vm863, %v847, %v692
        %v874 = vsel %vm863, %v849, %v694
        %v875 = vsel %vm863, %v850, %v694
        %v877 = vsel %vm863, %v852, %v696
        %v878 = vsel %vm863, %v853, %v696
        %v880 = vsel %vm863, %v855, %v698
        %v881 = vsel %vm863, %v856, %v698
        %v883 = vsel %vm863, %v858, %v700
        %v884 = vsel %vm863, %v859, %v700
        %v886 = vsel %vm863, %v861, %v702
        %v887 = vsel %vm863, %v862, %v702
        %vm888 = vcmask 195584
        %v890 = vsel %vm888, %v865, %v707
        %v892 = vsel %vm888, %v866, %v709
        %v893 = vsel %vm888, %v868, %v709
        %v895 = vsel %vm888, %v869, %v711
        %v896 = vsel %vm888, %v871, %v711
        %v898 = vsel %vm888, %v872, %v713
        %v899 = vsel %vm888, %v874, %v713
        %v901 = vsel %vm888, %v875, %v715
        %v902 = vsel %vm888, %v877, %v715
        %v904 = vsel %vm888, %v878, %v717
        %v905 = vsel %vm888, %v880, %v717
        %v907 = vsel %vm888, %v881, %v719
        %v908 = vsel %vm888, %v883, %v719
        %v910 = vsel %vm888, %v884, %v721
        %v911 = vsel %vm888, %v886, %v721
        %v913 = vsel %vm888, %v887, %v723
        %vm914 = vcmask 228352
        %v916 = vsel %vm914, %v890, %v728
        %v918 = vsel %vm914, %v892, %v730
        %v919 = vsel %vm914, %v893, %v730
        %v921 = vsel %vm914, %v895, %v732
        %v922 = vsel %vm914, %v896, %v732
        %v924 = vsel %vm914, %v898, %v734
        %v925 = vsel %vm914, %v899, %v734
        %v927 = vsel %vm914, %v901, %v736
        %v928 = vsel %vm914, %v902, %v736
        %v930 = vsel %vm914, %v904, %v738
        %v931 = vsel %vm914, %v905, %v738
        %v933 = vsel %vm914, %v907, %v740
        %v934 = vsel %vm914, %v908, %v740
        %v936 = vsel %vm914, %v910, %v742
        %v937 = vsel %vm914, %v911, %v742
        %v939 = vsel %vm914, %v913, %v744
        %vm940 = vcmask 261120
        %v942 = vsel %vm940, %v916, %v749
        %v944 = vsel %vm940, %v918, %v751
        %v945 = vsel %vm940, %v919, %v751
        %v947 = vsel %vm940, %v921, %v753
        %v948 = vsel %vm940, %v922, %v753
        %v950 = vsel %vm940, %v924, %v755
        %v951 = vsel %vm940, %v925, %v755
        %v953 = vsel %vm940, %v927, %v757
        %v954 = vsel %vm940, %v928, %v757
        %v956 = vsel %vm940, %v930, %v759
        %v957 = vsel %vm940, %v931, %v759
        %v959 = vsel %vm940, %v933, %v761
        %v960 = vsel %vm940, %v934, %v761
        %v962 = vsel %vm940, %v936, %v763
        %v963 = vsel %vm940, %v937, %v763
        %v965 = vsel %vm940, %v939, %v765
        %v966 = vld [vmem:[%s1] sm:$0xf]
        %v967 = vld [vmem:[%s1 + $0x4] sm:$0xf]
        %v968 = vld [vmem:[%s1 + $0x8] sm:$0xf]
        %v969 = vld [vmem:[%s1 + $0xc] sm:$0xf]
        %v970 = vld [vmem:[%s1 + $0x10] sm:$0x3]
        %v976 = vunpack.c.l.b16 %v966
        %v977 = vunpack.c.l.b16 %v967
        %v978 = vunpack.c.l.b16 %v968
        %v979 = vunpack.c.l.b16 %v969
        %v980 = vunpack.c.l.b16 %v970
        %v981 = vpack.c.b16 %v977, %v976
        %v982 = vpack.c.b16 %v979, %v978
        %v983 = vpack.c.b16 %v980, %v980
        %vm986 = vcmask 293888
        %v987 = vsel %vm986, %v942, 0
        %v989 = vsel %vm986, %v944, 0
        %v991 = vsel %vm986, %v945, 0
        %v993 = vsel %vm986, %v947, 0
        %v995 = vsel %vm986, %v948, 0
        %v997 = vsel %vm986, %v950, 0
        %v999 = vsel %vm986, %v951, 0
        %v1001 = vsel %vm986, %v953, 0
        %v1003 = vsel %vm986, %v954, 0
        %v1005 = vsel %vm986, %v956, 0
        %v1007 = vsel %vm986, %v957, 0
        %v1009 = vsel %vm986, %v959, 0
        %v1011 = vsel %vm986, %v960, 0
        %v1013 = vsel %vm986, %v962, 0
        %v1015 = vsel %vm986, %v963, 0
        %v1017 = vsel %vm986, %v965, 0
        %vm1019 = vcmask 1041408
        %v1021 = vsel %vm1019, %v983, 0
        %1023 = vmatprep.subr.bf16.mxu0 0
        %1024 = vmatpush1.bf16.msra.mxu0 %v981
        %1025 = vmatprep.subr.bf16.mxu0 0
        %1026 = vmatpush1.bf16.msra.mxu0 %v982
        %1027 = vmatprep.subr.bf16.mxu0 0
        %1028 = vmatpush1.bf16.msra.mxu0 %v1021
        %1029 = vmatprep.subr.bf16.mxu0 0
        %1030 = vmatpush1.bf16.msra.mxu0 0
        %1031 = vmatprep.subr.bf16.mxu0 0
        %1032 = vmatpush1.bf16.msra.mxu0 0
        %1033 = vmatprep.subr.bf16.mxu0 0
        %1034 = vmatpush1.bf16.msra.mxu0 0
        %1035 = vmatprep.subr.bf16.mxu0 0
        %1036 = vmatpush1.bf16.msra.mxu0 0
        %1037 = vmatprep.subr.bf16.mxu0 0
        %1038 = vmatpush1.bf16.msra.mxu0 0
        %1039 = vmatprep.subr.bf16.mxu0 0
        %1040 = vmatpush1.bf16.msra.mxu0 0
        %1041 = vmatprep.subr.bf16.mxu0 0
        %1042 = vmatpush1.bf16.msra.mxu0 0
        %1043 = vmatprep.subr.bf16.mxu0 0
        %1044 = vmatpush1.bf16.msra.mxu0 0
        %1045 = vmatprep.subr.bf16.mxu0 0
        %1046 = vmatpush1.bf16.msra.mxu0 0
        %1047 = vmatprep.subr.bf16.mxu0 0
        %1048 = vmatpush1.bf16.msra.mxu0 0
        %1049 = vmatprep.subr.bf16.mxu0 0
        %1050 = vmatpush1.bf16.msra.mxu0 0
        %1051 = vmatprep.subr.bf16.mxu0 0
        %1052 = vmatpush1.bf16.msra.mxu0 0
        %1053 = vmatprep.subr.bf16.mxu0 0
        %1054 = vmatpush1.bf16.msra.mxu0 0
        %1055 = vmatprep.mubr.bf16.mxu0 0
        %1056 = vmatmul.mubr.bf16.gmra.mrb[0].mxu0 %v987
        %v1057 = vpop.f32.mrb[0].mxu0
        %v1058 = vadd.f32 0.0, %v1057
        %v1059 = vpop.f32.mrb[0].mxu0
        %v1060 = vpop.f32.mrb[0].mxu0
        %v1061 = vadd.f32 0.0, %v1060
        %v1062 = vpop.f32.mrb[0].mxu0
        %1063 = vmatprep.mubr.bf16.mxu0 0
        %1064 = vmatmul.mubr.bf16.gmra.mrb[0].mxu0 %v989
        %v1065 = vpop.f32.mrb[0].mxu0
        %v1066 = vadd.f32 0.0, %v1065
        %v1067 = vpop.f32.mrb[0].mxu0
        %v1068 = vpop.f32.mrb[0].mxu0
        %v1069 = vadd.f32 0.0, %v1068
        %v1070 = vpop.f32.mrb[0].mxu0
        %1071 = vmatprep.mubr.bf16.mxu0 0
        %1072 = vmatmul.mubr.bf16.gmra.mrb[0].mxu0 %v991
        %v1073 = vpop.f32.mrb[0].mxu0
        %v1074 = vadd.f32 0.0, %v1073
        %v1075 = vpop.f32.mrb[0].mxu0
        %v1076 = vpop.f32.mrb[0].mxu0
        %v1077 = vadd.f32 0.0, %v1076
        %v1078 = vpop.f32.mrb[0].mxu0
        %1079 = vmatprep.mubr.bf16.mxu0 0
        %1080 = vmatmul.mubr.bf16.gmra.mrb[0].mxu0 %v993
        %v1081 = vpop.f32.mrb[0].mxu0
        %v1082 = vadd.f32 0.0, %v1081
        %v1083 = vpop.f32.mrb[0].mxu0
        %v1084 = vpop.f32.mrb[0].mxu0
        %v1085 = vadd.f32 0.0, %v1084
        %v1086 = vpop.f32.mrb[0].mxu0
        %1087 = vmatprep.mubr.bf16.mxu0 0
        %1088 = vmatmul.mubr.bf16.gmra.mrb[0].mxu0 %v995
        %v1089 = vpop.f32.mrb[0].mxu0
        %v1090 = vadd.f32 0.0, %v1089
        %v1091 = vpop.f32.mrb[0].mxu0
        %v1092 = vpop.f32.mrb[0].mxu0
        %v1093 = vadd.f32 0.0, %v1092
        %v1094 = vpop.f32.mrb[0].mxu0
        %1095 = vmatprep.mubr.bf16.mxu0 0
        %1096 = vmatmul.mubr.bf16.gmra.mrb[0].mxu0 %v997
        %v1097 = vpop.f32.mrb[0].mxu0
        %v1098 = vadd.f32 0.0, %v1097
        %v1099 = vpop.f32.mrb[0].mxu0
        %v1100 = vpop.f32.mrb[0].mxu0
        %v1101 = vadd.f32 0.0, %v1100
        %v1102 = vpop.f32.mrb[0].mxu0
        %1103 = vmatprep.mubr.bf16.mxu0 0
        %1104 = vmatmul.mubr.bf16.gmra.mrb[0].mxu0 %v999
        %v1105 = vpop.f32.mrb[0].mxu0
        %v1106 = vadd.f32 0.0, %v1105
        %v1107 = vpop.f32.mrb[0].mxu0
        %v1108 = vpop.f32.mrb[0].mxu0
        %v1109 = vadd.f32 0.0, %v1108
        %v1110 = vpop.f32.mrb[0].mxu0
        %1111 = vmatprep.mubr.bf16.mxu0 0
        %1112 = vmatmul.mubr.bf16.gmra.mrb[0].mxu0 %v1001
        %v1113 = vpop.f32.mrb[0].mxu0
        %v1114 = vadd.f32 0.0, %v1113
        %v1115 = vpop.f32.mrb[0].mxu0
        %v1116 = vpop.f32.mrb[0].mxu0
        %v1117 = vadd.f32 0.0, %v1116
        %v1118 = vpop.f32.mrb[0].mxu0
        %1119 = vmatprep.mubr.bf16.mxu0 0
        %1120 = vmatmul.mubr.bf16.gmra.mrb[0].mxu0 %v1003
        %v1121 = vpop.f32.mrb[0].mxu0
        %v1122 = vadd.f32 0.0, %v1121
        %v1123 = vpop.f32.mrb[0].mxu0
        %v1124 = vpop.f32.mrb[0].mxu0
        %v1125 = vadd.f32 0.0, %v1124
        %v1126 = vpop.f32.mrb[0].mxu0
        %1127 = vmatprep.mubr.bf16.mxu0 0
        %1128 = vmatmul.mubr.bf16.gmra.mrb[0].mxu0 %v1005
        %v1129 = vpop.f32.mrb[0].mxu0
        %v1130 = vadd.f32 0.0, %v1129
        %v1131 = vpop.f32.mrb[0].mxu0
        %v1132 = vpop.f32.mrb[0].mxu0
        %v1133 = vadd.f32 0.0, %v1132
        %v1134 = vpop.f32.mrb[0].mxu0
        %1135 = vmatprep.mubr.bf16.mxu0 0
        %1136 = vmatmul.mubr.bf16.gmra.mrb[0].mxu0 %v1007
        %v1137 = vpop.f32.mrb[0].mxu0
        %v1138 = vadd.f32 0.0, %v1137
        %v1139 = vpop.f32.mrb[0].mxu0
        %v1140 = vpop.f32.mrb[0].mxu0
        %v1141 = vadd.f32 0.0, %v1140
        %v1142 = vpop.f32.mrb[0].mxu0
        %1143 = vmatprep.mubr.bf16.mxu0 0
        %1144 = vmatmul.mubr.bf16.gmra.mrb[0].mxu0 %v1009
        %v1145 = vpop.f32.mrb[0].mxu0
        %v1146 = vadd.f32 0.0, %v1145
        %v1147 = vpop.f32.mrb[0].mxu0
        %v1148 = vpop.f32.mrb[0].mxu0
        %v1149 = vadd.f32 0.0, %v1148
        %v1150 = vpop.f32.mrb[0].mxu0
        %1151 = vmatprep.mubr.bf16.mxu0 0
        %1152 = vmatmul.mubr.bf16.gmra.mrb[0].mxu0 %v1011
        %v1153 = vpop.f32.mrb[0].mxu0
        %v1154 = vadd.f32 0.0, %v1153
        %v1155 = vpop.f32.mrb[0].mxu0
        %v1156 = vpop.f32.mrb[0].mxu0
        %v1157 = vadd.f32 0.0, %v1156
        %v1158 = vpop.f32.mrb[0].mxu0
        %1159 = vmatprep.mubr.bf16.mxu0 0
        %1160 = vmatmul.mubr.bf16.gmra.mrb[0].mxu0 %v1013
        %v1161 = vpop.f32.mrb[0].mxu0
        %v1162 = vadd.f32 0.0, %v1161
        %v1163 = vpop.f32.mrb[0].mxu0
        %v1164 = vpop.f32.mrb[0].mxu0
        %v1165 = vadd.f32 0.0, %v1164
        %v1166 = vpop.f32.mrb[0].mxu0
        %1167 = vmatprep.mubr.bf16.mxu0 0
        %1168 = vmatmul.mubr.bf16.gmra.mrb[0].mxu0 %v1015
        %v1169 = vpop.f32.mrb[0].mxu0
        %v1170 = vadd.f32 0.0, %v1169
        %v1171 = vpop.f32.mrb[0].mxu0
        %v1172 = vpop.f32.mrb[0].mxu0
        %v1173 = vadd.f32 0.0, %v1172
        %v1174 = vpop.f32.mrb[0].mxu0
        %1175 = vmatprep.mubr.bf16.mxu0 0
        %1176 = vmatmul.mubr.bf16.gmra.mrb[0].mxu0 %v1017
        %v1177 = vpop.f32.mrb[0].mxu0
        %v1178 = vadd.f32 0.0, %v1177
        %v1179 = vpop.f32.mrb[0].mxu0
        %v1180 = vpop.f32.mrb[0].mxu0
        %v1181 = vadd.f32 0.0, %v1180
        %v1182 = vpop.f32.mrb[0].mxu0
        %1183 = vdwg.mxu0
        %vm1184 = vcmp.ge.f32.partialorder %v1058, 0.0
        %vm1185 = vcmp.ge.f32.partialorder %v1061, 0.0
        %vm1186 = vcmp.ge.f32.partialorder %v1066, 0.0
        %vm1187 = vcmp.ge.f32.partialorder %v1069, 0.0
        %vm1188 = vcmp.ge.f32.partialorder %v1074, 0.0
        %vm1189 = vcmp.ge.f32.partialorder %v1077, 0.0
        %vm1190 = vcmp.ge.f32.partialorder %v1082, 0.0
        %vm1191 = vcmp.ge.f32.partialorder %v1085, 0.0
        %vm1192 = vcmp.ge.f32.partialorder %v1090, 0.0
        %vm1193 = vcmp.ge.f32.partialorder %v1093, 0.0
        %vm1194 = vcmp.ge.f32.partialorder %v1098, 0.0
        %vm1195 = vcmp.ge.f32.partialorder %v1101, 0.0
        %vm1196 = vcmp.ge.f32.partialorder %v1106, 0.0
        %vm1197 = vcmp.ge.f32.partialorder %v1109, 0.0
        %vm1198 = vcmp.ge.f32.partialorder %v1114, 0.0
        %vm1199 = vcmp.ge.f32.partialorder %v1117, 0.0
        %vm1200 = vcmp.ge.f32.partialorder %v1122, 0.0
        %vm1201 = vcmp.ge.f32.partialorder %v1125, 0.0
        %vm1202 = vcmp.ge.f32.partialorder %v1130, 0.0
        %vm1203 = vcmp.ge.f32.partialorder %v1133, 0.0
        %vm1204 = vcmp.ge.f32.partialorder %v1138, 0.0
        %vm1205 = vcmp.ge.f32.partialorder %v1141, 0.0
        %vm1206 = vcmp.ge.f32.partialorder %v1146, 0.0
        %vm1207 = vcmp.ge.f32.partialorder %v1149, 0.0
        %vm1208 = vcmp.ge.f32.partialorder %v1154, 0.0
        %vm1209 = vcmp.ge.f32.partialorder %v1157, 0.0
        %vm1210 = vcmp.ge.f32.partialorder %v1162, 0.0
        %vm1211 = vcmp.ge.f32.partialorder %v1165, 0.0
        %vm1212 = vcmp.ge.f32.partialorder %v1170, 0.0
        %vm1213 = vcmp.ge.f32.partialorder %v1173, 0.0
        %vm1214 = vcmp.ge.f32.partialorder %v1178, 0.0
        %vm1215 = vcmp.ge.f32.partialorder %v1181, 0.0
        %v1216 = vmul.f32 %v1058, 0.1
        %v1217 = vmul.f32 %v1061, 0.1
        %v1218 = vmul.f32 %v1066, 0.1
        %v1219 = vmul.f32 %v1069, 0.1
        %v1220 = vmul.f32 %v1074, 0.1
        %v1221 = vmul.f32 %v1077, 0.1
        %v1222 = vmul.f32 %v1082, 0.1
        %v1223 = vmul.f32 %v1085, 0.1
        %v1224 = vmul.f32 %v1090, 0.1
        %v1225 = vmul.f32 %v1093, 0.1
        %v1226 = vmul.f32 %v1098, 0.1
        %v1227 = vmul.f32 %v1101, 0.1
        %v1228 = vmul.f32 %v1106, 0.1
        %v1229 = vmul.f32 %v1109, 0.1
        %v1230 = vmul.f32 %v1114, 0.1
        %v1231 = vmul.f32 %v1117, 0.1
        %v1232 = vmul.f32 %v1122, 0.1
        %v1233 = vmul.f32 %v1125, 0.1
        %v1234 = vmul.f32 %v1130, 0.1
        %v1235 = vmul.f32 %v1133, 0.1
        %v1236 = vmul.f32 %v1138, 0.1
        %v1237 = vmul.f32 %v1141, 0.1
        %v1238 = vmul.f32 %v1146, 0.1
        %v1239 = vmul.f32 %v1149, 0.1
        %v1240 = vmul.f32 %v1154, 0.1
        %v1241 = vmul.f32 %v1157, 0.1
        %v1242 = vmul.f32 %v1162, 0.1
        %v1243 = vmul.f32 %v1165, 0.1
        %v1244 = vmul.f32 %v1170, 0.1
        %v1245 = vmul.f32 %v1173, 0.1
        %v1246 = vmul.f32 %v1178, 0.1
        %v1247 = vmul.f32 %v1181, 0.1
        %v1248 = vsel %vm1184, %v1058, %v1216
        %v1249 = vsel %vm1185, %v1061, %v1217
        %v1250 = vsel %vm1186, %v1066, %v1218
        %v1251 = vsel %vm1187, %v1069, %v1219
        %v1252 = vsel %vm1188, %v1074, %v1220
        %v1253 = vsel %vm1189, %v1077, %v1221
        %v1254 = vsel %vm1190, %v1082, %v1222
        %v1255 = vsel %vm1191, %v1085, %v1223
        %v1256 = vsel %vm1192, %v1090, %v1224
        %v1257 = vsel %vm1193, %v1093, %v1225
        %v1258 = vsel %vm1194, %v1098, %v1226
        %v1259 = vsel %vm1195, %v1101, %v1227
        %v1260 = vsel %vm1196, %v1106, %v1228
        %v1261 = vsel %vm1197, %v1109, %v1229
        %v1262 = vsel %vm1198, %v1114, %v1230
        %v1263 = vsel %vm1199, %v1117, %v1231
        %v1264 = vsel %vm1200, %v1122, %v1232
        %v1265 = vsel %vm1201, %v1125, %v1233
        %v1266 = vsel %vm1202, %v1130, %v1234
        %v1267 = vsel %vm1203, %v1133, %v1235
        %v1268 = vsel %vm1204, %v1138, %v1236
        %v1269 = vsel %vm1205, %v1141, %v1237
        %v1270 = vsel %vm1206, %v1146, %v1238
        %v1271 = vsel %vm1207, %v1149, %v1239
        %v1272 = vsel %vm1208, %v1154, %v1240
        %v1273 = vsel %vm1209, %v1157, %v1241
        %v1274 = vsel %vm1210, %v1162, %v1242
        %v1275 = vsel %vm1211, %v1165, %v1243
        %v1276 = vsel %vm1212, %v1170, %v1244
        %v1277 = vsel %vm1213, %v1173, %v1245
        %v1278 = vsel %vm1214, %v1178, %v1246
        %v1279 = vsel %vm1215, %v1181, %v1247
        %1280 = vxpose.xlu0.b32.start [1/16] %v1248, 128
        %1281 = vxpose.xlu0.b32.cont [2/16] %v1249, 128
        %1282 = vxpose.xlu0.b32.cont [3/16] %v1250, 128
        %1283 = vxpose.xlu0.b32.cont [4/16] %v1251, 128
        %1284 = vxpose.xlu0.b32.cont [5/16] %v1252, 128
        %1285 = vxpose.xlu0.b32.cont [6/16] %v1253, 128
        %1286 = vxpose.xlu0.b32.cont [7/16] %v1254, 128
        %1287 = vxpose.xlu0.b32.cont [8/16] %v1255, 128
        %1288 = vxpose.xlu0.b32.cont [9/16] %v1256, 128
        %1289 = vxpose.xlu0.b32.cont [10/16] %v1257, 128
        %1290 = vxpose.xlu0.b32.cont [11/16] %v1258, 128
        %1291 = vxpose.xlu0.b32.cont [12/16] %v1259, 128
        %1292 = vxpose.xlu0.b32.cont [13/16] %v1260, 128
        %1293 = vxpose.xlu0.b32.cont [14/16] %v1261, 128
        %1294 = vxpose.xlu0.b32.cont [15/16] %v1262, 128
        %1295 = vxpose.xlu0.b32.end [16/16] %v1263, 128
        %v1296 = vpop.trf.xlu0
        %v1297 = vpop.trf.xlu0
        %v1298 = vpop.trf.xlu0
        %v1299 = vpop.trf.xlu0
        %v1300 = vpop.trf.xlu0
        %v1301 = vpop.trf.xlu0
        %v1302 = vpop.trf.xlu0
        %v1303 = vpop.trf.xlu0
        %v1304 = vpop.trf.xlu0
        %v1305 = vpop.trf.xlu0
        %v1306 = vpop.trf.xlu0
        %v1307 = vpop.trf.xlu0
        %v1308 = vpop.trf.xlu0
        %v1309 = vpop.trf.xlu0
        %v1310 = vpop.trf.xlu0
        %v1311 = vpop.trf.xlu0
        %1312 = vxpose.xlu0.b32.start [1/16] %v1264, 128
        %1313 = vxpose.xlu0.b32.cont [2/16] %v1265, 128
        %1314 = vxpose.xlu0.b32.cont [3/16] %v1266, 128
        %1315 = vxpose.xlu0.b32.cont [4/16] %v1267, 128
        %1316 = vxpose.xlu0.b32.cont [5/16] %v1268, 128
        %1317 = vxpose.xlu0.b32.cont [6/16] %v1269, 128
        %1318 = vxpose.xlu0.b32.cont [7/16] %v1270, 128
        %1319 = vxpose.xlu0.b32.cont [8/16] %v1271, 128
        %1320 = vxpose.xlu0.b32.cont [9/16] %v1272, 128
        %1321 = vxpose.xlu0.b32.cont [10/16] %v1273, 128
        %1322 = vxpose.xlu0.b32.cont [11/16] %v1274, 128
        %1323 = vxpose.xlu0.b32.cont [12/16] %v1275, 128
        %1324 = vxpose.xlu0.b32.cont [13/16] %v1276, 128
        %1325 = vxpose.xlu0.b32.cont [14/16] %v1277, 128
        %1326 = vxpose.xlu0.b32.cont [15/16] %v1278, 128
        %1327 = vxpose.xlu0.b32.end [16/16] %v1279, 128
        %v1328 = vpop.trf.xlu0
        %v1329 = vpop.trf.xlu0
        %v1330 = vpop.trf.xlu0
        %v1331 = vpop.trf.xlu0
        %v1332 = vpop.trf.xlu0
        %v1333 = vpop.trf.xlu0
        %v1334 = vpop.trf.xlu0
        %v1335 = vpop.trf.xlu0
        %v1336 = vpop.trf.xlu0
        %v1337 = vpop.trf.xlu0
        %v1338 = vpop.trf.xlu0
        %v1339 = vpop.trf.xlu0
        %v1340 = vpop.trf.xlu0
        %v1341 = vpop.trf.xlu0
        %v1342 = vpop.trf.xlu0
        %v1343 = vpop.trf.xlu0
        %1344 = vst [vmem:[%s150] sm:$0xff] %v1296
        %1345 = vst [vmem:[%s150 + $0x8] sm:$0xff] %v1328
        %s1346 = sand.u32 %s85, 1
        %s1347 = scalar_lea.sflag [#allocation3], %s1346
        %s1348 = sand.u32 %s85, 1
        %s1349 = smul.addr %s1348, 16
        %s1350 = scalar_lea.vmem [#allocation2], %s1349
        // Predicated region
        $region29: #{tpu_custom_call.1} parent=27 // pred_check
          %p1351 = pneg %p95
        $region30: #{tpu_custom_call.1} parent=27 // pred_check_branch
          %1353 = sbr.rel (%p1351) target = $region32
        $region31: #{tpu_custom_call.1} parent=27 // pred_region
          %s1354 = smul.u32 2, %s21
          %s1356 = ssub.s32 256, 256
          %1357 = vsyncadd %s1347, %s1356
          %s1358 = smul.addr %s20, 2
          %s1359 = sadd.s32 %s1354, %s1358
          %s1360 = smul.addr %s1359, 128
          %s1361 = scalar_lea.hbm %s2, %s1360
          %s1363 = sshll.u32 %s1350, 4
          %s1364 = int_to_ptr.vmem [resolvable:$true] %s1363
          %1366 = dma.vmem_to_hbm [thread:$0]  %s1364, 256, %s1361, %s1347
        $region32: #{tpu_custom_call.1} parent=27 // pred_fallthru
          _
      $region28: #{tpu_custom_call.1} parent=5 // pred_fallthru
        _
      %p1367 = scmp.le.s32.totalorder 2, %s11
      // Predicated region
      $region33: #{tpu_custom_call.1} parent=5 // pred_check
        %p1368 = pneg %p1367
      $region34: #{tpu_custom_call.1} parent=5 // pred_check_branch
        %1370 = sbr.rel (%p1368) target = $region36
      $region35: #{tpu_custom_call.1} parent=5 // pred_region
        %s1371 = ssub.s32 %s11, 2
        // Predicated region
        $region37: #{tpu_custom_call.1} parent=35 // pred_check
          %p1372 = pneg %p101
        $region38: #{tpu_custom_call.1} parent=35 // pred_check_branch
          %1374 = sbr.rel (%p1372) target = $region40
        $region39: #{tpu_custom_call.1} parent=35 // pred_region
          %s1375 = sand.u32 %s86, 1
          %s1376 = scalar_lea.sflag [#allocation3], %s1375
          %s1377 = sand.u32 %s86, 1
          %s1378 = smul.addr %s1377, 16
          %s1379 = scalar_lea.vmem [#allocation2], %s1378
          %1380 = dma.done %s1376, 256
        $region40: #{tpu_custom_call.1} parent=35 // pred_fallthru
          _
      $region36: #{tpu_custom_call.1} parent=5 // pred_fallthru
        _
    $region6: #{tpu_custom_call.1} parent=1 // loop_footer
      %s15 = sadd.s32 1, %s11
    $region7: #{tpu_custom_call.1} parent=1 // loop_footer_branch
      %10 = sbr.rel target = $region3
    $region8: #{tpu_custom_call.1} parent=1 // loop_exit
      _
    %1381 = vsyncpa [#allocation3], 1
    %s1382 = scalar_lea.sflag [#allocation3], 1
    %1383 = vsyncpa %s1382, 1

</llo_original>
